<compile_context>
chip_gen: v6e
topology: v6e:2x2x1
jax: 0.10.0
libtpu: 0.0.40
codegen_flags: <defaults>
</compile_context>

<pallas_src>
import jax
import jax.numpy as jnp
from jax.experimental import pallas as pl
from jax.experimental.pallas import tpu as pltpu

_LANE = 128            # lane width (last dim alignment)
_BF16_SUBLANE = 16     # bf16 packs 16 rows per vreg sublane group
_TB_TARGET = 256       # batch tile cap (fatter grid steps amortize ~0.35us/step)
_TK_TARGET = 512       # in_features (K) tile cap
_TC_TARGET = 512       # num_classes (N) tile cap (multiple of 256 for v6e/v7x MXU)


def _round_up(v, m):
    return ((v + m - 1) // m) * m


def _largest_tile(dim, cap, align=_LANE):
    """Largest multiple of `align` that divides `dim` and is <= cap (dim if dim<=cap)."""
    if dim <= cap:
        return dim
    t = cap - (cap % align)
    while t >= align:
        if dim % t == 0:
            return t
        t -= align
    return dim


def _pad_classes(C):
    C_pad = _round_up(max(C, _LANE), _LANE)
    if C_pad > _LANE:
        # v6e/v7x MXU is 2x256x256: keep the class axis a multiple of 256.
        C_pad = _round_up(C_pad, 256)
    if C_pad > _TC_TARGET:
        C_pad = _round_up(C_pad, _TC_TARGET)
    return C_pad


def _pad_features(D):
    D_pad = _round_up(max(D, _LANE), _LANE)
    if D_pad > _TK_TARGET:
        D_pad = _round_up(D_pad, _TK_TARGET)
    return D_pad


def _linear_kernel(x_ref, w_ref, b_ref, o_ref, acc_ref):
    # x_ref: (TB, TK) bf16 | w_ref: (TK, TC) bf16 | b_ref: (1, TC) f32
    # o_ref: (TB, TC) f32  | acc_ref: (TB, TC) f32 scratch
    k = pl.program_id(2)

    @pl.when(k == 0)
    def _():
        acc_ref[...] = jnp.zeros_like(acc_ref)

    acc_ref[...] += jnp.dot(
        x_ref[...], w_ref[...], preferred_element_type=jnp.float32
    )

    @pl.when(k == pl.num_programs(2) - 1)
    def _():
        o_ref[...] = (acc_ref[...] + b_ref[...]).astype(o_ref.dtype)


def prepare_fc_params(weight, bias):
    """Hoisted, call-once param prep: pre-transpose + pad + bf16-cast the weight.

    weight: (num_classes, in_features) -> (D_pad, C_pad) bf16
    bias:   (num_classes,)             -> (1, C_pad)    f32
    """
    C, D = weight.shape
    assert bias.shape == (C,)
    D_pad = _pad_features(D)
    C_pad = _pad_classes(C)

    w_t = weight.astype(jnp.bfloat16).T  # (D, C): lane = classes, no in-kernel transpose
    if (D_pad, C_pad) != (D, C):
        w_t = jnp.pad(w_t, ((0, D_pad - D), (0, C_pad - C)))
    b_p = bias.astype(jnp.float32)
    if C_pad != C:
        b_p = jnp.pad(b_p, (0, C_pad - C))
    return w_t, b_p.reshape(1, C_pad)


def fully_connected_forward(x, w_t, b_p, num_classes):
    """y = x @ W.T + b using pre-padded params from prepare_fc_params."""
    B, D = x.shape
    D_pad, C_pad = w_t.shape
    assert D <= D_pad and b_p.shape == (1, C_pad)

    # --- tile plan -----------------------------------------------------------
    TK = _largest_tile(D_pad, _TK_TARGET)
    TC = _largest_tile(C_pad, _TC_TARGET)
    B_pad = _round_up(max(B, _BF16_SUBLANE), _BF16_SUBLANE)
    if B_pad > _TB_TARGET:
        B_pad = _round_up(B_pad, _TB_TARGET)
        TB = _TB_TARGET
    else:
        TB = B_pad

    # --- activations: bf16 cast, pad only if ragged --------------------------
    x_b = x.astype(jnp.bfloat16)
    if (B_pad, D_pad) != (B, D):
        x_b = jnp.pad(x_b, ((0, B_pad - B), (0, D_pad - D)))

    grid = (B_pad // TB, C_pad // TC, D_pad // TK)

    # --- VMEM budget (double-buffered streams + accumulator) + cost hint -----
    vmem_need = (
        2 * TB * TK * 2          # x tiles (bf16)
        + 2 * TK * TC * 2        # weight tiles (bf16)
        + 2 * 1 * TC * 4         # bias tiles (f32)
        + 2 * TB * TC * 4        # output tiles (f32)
        + TB * TC * 4            # accumulator scratch (f32)
    )
    vmem_limit = int(min(max(2 * vmem_need, 16 << 20), 48 << 20))  # v7x-safe cap

    bytes_accessed = (
        B_pad * D_pad * 2            # read x once per class-tile pass (lower bound)
        + D_pad * C_pad * 2          # stream weight
        + C_pad * 4                  # bias
        + B_pad * C_pad * 4          # write output
    )
    cost = pl.CostEstimate(
        flops=2 * B_pad * D_pad * C_pad,
        transcendentals=0,
        bytes_accessed=int(bytes_accessed),
    )

    out = pl.pallas_call(
        _linear_kernel,
        out_shape=jax.ShapeDtypeStruct((B_pad, C_pad), jnp.float32),
        grid_spec=pltpu.PrefetchScalarGridSpec(
            num_scalar_prefetch=0,
            grid=grid,
            in_specs=[
                pl.BlockSpec((TB, TK), lambda i, j, k: (i, k)),   # x tile
                pl.BlockSpec((TK, TC), lambda i, j, k: (k, j)),   # weight tile (streamed)
                pl.BlockSpec((1, TC), lambda i, j, k: (0, j)),    # bias tile
            ],
            out_specs=pl.BlockSpec((TB, TC), lambda i, j, k: (i, j)),
            scratch_shapes=[pltpu.VMEM((TB, TC), jnp.float32)],
        ),
        compiler_params=pltpu.CompilerParams(
            dimension_semantics=("parallel", "parallel", "arbitrary"),
            vmem_limit_bytes=vmem_limit,
        ),
        cost_estimate=cost,
    )(x_b, w_t, b_p)

    return out[:B, :num_classes]


def fully_connected_apply(x, weight, bias):
    """Convenience path: prep params + forward (matches nn.Linear forward)."""
    w_t, b_p = prepare_fc_params(weight, bias)
    return fully_connected_forward(x, w_t, b_p, weight.shape[0])


def _reference(x, weight, bias):
    return x @ weight.T + bias[None, :]


if __name__ == "__main__":
    key = jax.random.PRNGKey(0)
    k_x, k_w, k_b = jax.random.split(key, 3)

    B, IN_FEATURES, NUM_CLASSES = 8, 32, 4

    x = jax.random.normal(k_x, (B, IN_FEATURES), dtype=jnp.float32)
    weight = jax.random.normal(k_w, (NUM_CLASSES, IN_FEATURES), dtype=jnp.float32) * 0.1
    bias = jax.random.normal(k_b, (NUM_CLASSES,), dtype=jnp.float32) * 0.1

    # Params are prepped once (hoisted transpose/pad/bf16-cast), reused per call.
    w_t, b_p = prepare_fc_params(weight, bias)
    out = fully_connected_forward(x, w_t, b_p, NUM_CLASSES)
    out = jax.block_until_ready(out)

    ref = _reference(x, weight, bias)
    assert out.shape == (B, NUM_CLASSES), out.shape
    # bf16 matmul inputs -> loosened tolerance vs. the f32 reference.
    assert jnp.allclose(out, ref, atol=2e-2, rtol=2e-2), (out, ref)

    print("KERNEL_OK")
</pallas_src>

<mosaic_0001>
module attributes {stable_mosaic.version = 11 : i64} {
  func.func @_linear_kernel(%arg0: i32, %arg1: i32, %arg2: i32, %arg3: memref<16x128xbf16, #tpu.memory_space<vmem>>, %arg4: memref<128x128xbf16, #tpu.memory_space<vmem>>, %arg5: memref<1x128xf32, #tpu.memory_space<vmem>>, %arg6: memref<16x128xf32, #tpu.memory_space<vmem>>, %arg7: memref<16x128xf32, #tpu.memory_space<vmem>>) attributes {dimension_semantics = [#tpu.dimension_semantics<parallel>, #tpu.dimension_semantics<parallel>, #tpu.dimension_semantics<arbitrary>], iteration_bounds = array<i64: 1, 1, 1>, scalar_prefetch = 0 : i64, scratch_operands = 1 : i64, tpu.core_type = #tpu.core_type<tc>, window_params = [{transform_indices = @transform_0, window_bounds = array<i64: 16, 128>}, {transform_indices = @transform_1, window_bounds = array<i64: 128, 128>}, {transform_indices = @transform_2, window_bounds = array<i64: 1, 128>}, {transform_indices = @transform_3, window_bounds = array<i64: 16, 128>}]} {
    %c0_i32 = arith.constant 0 : i32
    %0 = arith.cmpi eq, %arg2, %c0_i32 : i32
    %1 = arith.extui %0 : i1 to i32
    %c0_i32_0 = arith.constant 0 : i32
    %2 = arith.cmpi ne, %1, %c0_i32_0 : i32
    scf.if %2 {
      %cst_10 = arith.constant 0.000000e+00 : f32
      %12 = vector.broadcast %cst_10 : f32 to vector<16x128xf32>
      %c0_11 = arith.constant 0 : index
      %c0_12 = arith.constant 0 : index
      %13 = vector.load %arg7[%c0_11, %c0_12] : memref<16x128xf32, #tpu.memory_space<vmem>>, vector<16x128xf32>
      tpu.vector_store %arg7[%c0_11, %c0_12], %12 {strides = array<i32>} : memref<16x128xf32, #tpu.memory_space<vmem>>, vector<16x128xf32>,
    } else {
    }
    %c0 = arith.constant 0 : index
    %c0_1 = arith.constant 0 : index
    %3 = vector.load %arg7[%c0, %c0_1] : memref<16x128xf32, #tpu.memory_space<vmem>>, vector<16x128xf32>
    %c0_2 = arith.constant 0 : index
    %c0_3 = arith.constant 0 : index
    %4 = vector.load %arg3[%c0_2, %c0_3] : memref<16x128xbf16, #tpu.memory_space<vmem>>, vector<16x128xbf16>
    %c0_4 = arith.constant 0 : index
    %c0_5 = arith.constant 0 : index
    %5 = vector.load %arg4[%c0_4, %c0_5] : memref<128x128xbf16, #tpu.memory_space<vmem>>, vector<128x128xbf16>
    %cst = arith.constant dense<0.000000e+00> : vector<16x128xf32>
    %6 = tpu.matmul %4, %5, %cst {dimension_numbers = #tpu.dot_dimension_numbers<[1], [0], [0], [1], [0, 0, 1, 1], [], []>} : vector<16x128xbf16>, vector<128x128xbf16>, vector<16x128xf32> -> vector<16x128xf32>
    %7 = arith.addf %3, %6 : vector<16x128xf32>
    %c0_6 = arith.constant 0 : index
    %c0_7 = arith.constant 0 : index
    %8 = vector.load %arg7[%c0_6, %c0_7] : memref<16x128xf32, #tpu.memory_space<vmem>>, vector<16x128xf32>
    tpu.vector_store %arg7[%c0_6, %c0_7], %7 {strides = array<i32>} : memref<16x128xf32, #tpu.memory_space<vmem>>, vector<16x128xf32>,
    %c0_i32_8 = arith.constant 0 : i32
    %9 = arith.cmpi eq, %arg2, %c0_i32_8 : i32
    %10 = arith.extui %9 : i1 to i32
    %c0_i32_9 = arith.constant 0 : i32
    %11 = arith.cmpi ne, %10, %c0_i32_9 : i32
    scf.if %11 {
      %c0_10 = arith.constant 0 : index
      %c0_11 = arith.constant 0 : index
      %12 = vector.load %arg7[%c0_10, %c0_11] : memref<16x128xf32, #tpu.memory_space<vmem>>, vector<16x128xf32>
      %c0_12 = arith.constant 0 : index
      %c0_13 = arith.constant 0 : index
      %13 = vector.load %arg5[%c0_12, %c0_13] : memref<1x128xf32, #tpu.memory_space<vmem>>, vector<1x128xf32>
      %14 = vector.broadcast %13 : vector<1x128xf32> to vector<16x128xf32>
      %15 = arith.addf %12, %14 : vector<16x128xf32>
      %c0_14 = arith.constant 0 : index
      %c0_15 = arith.constant 0 : index
      %16 = vector.load %arg6[%c0_14, %c0_15] : memref<16x128xf32, #tpu.memory_space<vmem>>, vector<16x128xf32>
      tpu.vector_store %arg6[%c0_14, %c0_15], %15 {strides = array<i32>} : memref<16x128xf32, #tpu.memory_space<vmem>>, vector<16x128xf32>,
    } else {
    }
    return
  }
  func.func @transform_0(%arg0: i32, %arg1: i32, %arg2: i32) -> (i32, i32) {
    %c0_i32 = arith.constant 0 : i32
    return %arg0, %arg2 : i32, i32
  }
  func.func @transform_1(%arg0: i32, %arg1: i32, %arg2: i32) -> (i32, i32) {
    %c0_i32 = arith.constant 0 : i32
    return %arg2, %arg1 : i32, i32
  }
  func.func @transform_2(%arg0: i32, %arg1: i32, %arg2: i32) -> (i32, i32) {
    %c0_i32 = arith.constant 0 : i32
    %c0_i32_0 = arith.constant 0 : i32
    return %c0_i32, %arg1 : i32, i32
  }
  func.func @transform_3(%arg0: i32, %arg1: i32, %arg2: i32) -> (i32, i32) {
    %c0_i32 = arith.constant 0 : i32
    return %arg0, %arg1 : i32, i32
  }
}

</mosaic_0001>

<llo_original>
// kernel: tpu_custom_call.1
$region0: #{tpu_custom_call.1}
  #allocation0 [shape = 'u32[]', space=smem, size = 0x4, offset = 0x4, fixed_abs, tag = 'smem constant byte address 0x4 - core index']
  #allocation1 [shape = 'u32[144,128]{1,0:T(1,128)}', space=vmem, size = 0x12000, scoped, tag = 'internal scratch']
  #allocation2 [shape = 'f32[16,128]{1,0:T(8,128)}', space=vmem, size = 0x2000, scoped, tag = 'scratch operand']
  %s0 = inlined_call_operand.hbm [shape: bf16[16,128], index: 0, kind: input, shape index: {}]
  %s1 = inlined_call_operand.hbm [shape: bf16[128,128], index: 1, kind: input, shape index: {}]
  %s2 = inlined_call_operand.vmem [shape: f32[1,128], index: 2, kind: input, shape index: {}]
  %s3 = inlined_call_operand.hbm [shape: f32[16,128], index: 3, kind: output, shape index: {}]
  %s4 = sld [smem:[#allocation0]]
  $region38: #{tpu_custom_call.1} parent=0
    _
  %s6 = ssub.s32 1, %s4
  %s7 = scalar_select 0, %s6, %s4
  $region1: #{tpu_custom_call.1} parent=0
    #allocation3 [shape = 'u8[4096]{0}', space=vmem, size = 0x1000, scoped, tag = 'input window, operand 0, single buffered']
    #allocation4 [shape = 's32[1]{0}', space=sflag, size = 0x4, scoped, tag = 'scoped memory for tpu_custom_call.1']
    #allocation5 [shape = 's32[1]{0}', space=sflag, size = 0x4, scoped, tag = 'scoped memory for tpu_custom_call.1']
    #allocation6 [shape = 'u8[32768]{0}', space=vmem, size = 0x8000, scoped, tag = 'input window, operand 1, single buffered']
    #allocation7 [shape = 's32[1]{0}', space=sflag, size = 0x4, scoped, tag = 'scoped memory for tpu_custom_call.1']
    #allocation8 [shape = 'u8[8192]{0}', space=vmem, size = 0x2000, scoped, tag = 'output window, operand 0, single buffered']
    %8 = vsyncpa [#allocation4], 0
    %9 = vsyncpa [#allocation7], 0
    %10 = vsyncpa [#allocation5], 0
    // Predicated region
    $region2: #{tpu_custom_call.1} parent=1 // pred_check
      _
    $region3: #{tpu_custom_call.1} parent=1 // pred_check_branch
      %12 = sbr.rel (0) target = $region5
    $region4: #{tpu_custom_call.1} parent=1 // pred_region
      %s14 = ssub.s32 128, 128
      %15 = vsyncadd [#allocation4], %s14
      %s16 = sshll.u32 [#allocation3], 4
      %s17 = int_to_ptr.vmem [resolvable:$true] %s16
      %22 = dma.hbm_to_vmem [thread:$0]  %s0, 128, %s17, [#allocation4], 64, 64, 4
    $region5: #{tpu_custom_call.1} parent=1 // pred_fallthru
      _
    // Predicated region
    $region6: #{tpu_custom_call.1} parent=1 // pred_check
      _
    $region7: #{tpu_custom_call.1} parent=1 // pred_check_branch
      %24 = sbr.rel (0) target = $region9
    $region8: #{tpu_custom_call.1} parent=1 // pred_region
      %s26 = ssub.s32 1024, 1024
      %27 = vsyncadd [#allocation7], %s26
      %s28 = sshll.u32 [#allocation6], 4
      %s29 = int_to_ptr.vmem [resolvable:$true] %s28
      %34 = dma.hbm_to_vmem [thread:$0]  %s1, 1024, %s29, [#allocation7], 64, 64, 4
    $region9: #{tpu_custom_call.1} parent=1 // pred_fallthru
      _
    // Predicated region
    $region10: #{tpu_custom_call.1} parent=1 // pred_check
      _
    $region11: #{tpu_custom_call.1} parent=1 // pred_check_branch
      %36 = sbr.rel (0) target = $region13
    $region12: #{tpu_custom_call.1} parent=1 // pred_region
      _
    $region13: #{tpu_custom_call.1} parent=1 // pred_fallthru
      _
    // Predicated region
    $region14: #{tpu_custom_call.1} parent=1 // pred_check
      _
    $region15: #{tpu_custom_call.1} parent=1 // pred_check_branch
      %38 = sbr.rel (0) target = $region17
    $region16: #{tpu_custom_call.1} parent=1 // pred_region
      %39 = dma.done [#allocation4], 128
    $region17: #{tpu_custom_call.1} parent=1 // pred_fallthru
      _
    // Predicated region
    $region18: #{tpu_custom_call.1} parent=1 // pred_check
      _
    $region19: #{tpu_custom_call.1} parent=1 // pred_check_branch
      %41 = sbr.rel (0) target = $region21
    $region20: #{tpu_custom_call.1} parent=1 // pred_region
      %42 = dma.done [#allocation7], 1024
    $region21: #{tpu_custom_call.1} parent=1 // pred_fallthru
      _
    %p44 = scmp.eq.s32.totalorder 0, 0
    // Predicated region
    $region22: #{tpu_custom_call.1} parent=1 // pred_check
      %p45 = pneg %p44
    $region23: #{tpu_custom_call.1} parent=1 // pred_check_branch
      %47 = sbr.rel (%p45) target = $region25
    $region24: #{tpu_custom_call.1} parent=1 // pred_region
      %48 = vst [vmem:[#allocation2] sm:$0xff] 0.0
      %49 = vst [vmem:[#allocation2 + $0x8] sm:$0xff] 0.0
    $region25: #{tpu_custom_call.1} parent=1 // pred_fallthru
      _
    %v50 = vld [vmem:[#allocation2] sm:$0xff]
    %v51 = vld [vmem:[#allocation2 + $0x8] sm:$0xff]
    %v52 = vld [vmem:[#allocation3] sm:$0xf]
    %v53 = vld [vmem:[#allocation3 + $0x4] sm:$0xf]
    %v54 = vld [vmem:[#allocation6] sm:$0xf]
    %v55 = vld [vmem:[#allocation6 + $0x4] sm:$0xf]
    %v56 = vld [vmem:[#allocation6 + $0x8] sm:$0xf]
    %v57 = vld [vmem:[#allocation6 + $0xc] sm:$0xf]
    %v58 = vld [vmem:[#allocation6 + $0x10] sm:$0xf]
    %v59 = vld [vmem:[#allocation6 + $0x14] sm:$0xf]
    %v60 = vld [vmem:[#allocation6 + $0x18] sm:$0xf]
    %v61 = vld [vmem:[#allocation6 + $0x1c] sm:$0xf]
    %v62 = vld [vmem:[#allocation6 + $0x20] sm:$0xf]
    %v63 = vld [vmem:[#allocation6 + $0x24] sm:$0xf]
    %v64 = vld [vmem:[#allocation6 + $0x28] sm:$0xf]
    %v65 = vld [vmem:[#allocation6 + $0x2c] sm:$0xf]
    %v66 = vld [vmem:[#allocation6 + $0x30] sm:$0xf]
    %v67 = vld [vmem:[#allocation6 + $0x34] sm:$0xf]
    %v68 = vld [vmem:[#allocation6 + $0x38] sm:$0xf]
    %v69 = vld [vmem:[#allocation6 + $0x3c] sm:$0xf]
    %v72 = vunpack.c.l.b16 %v52
    %v73 = vunpack.c.l.b16 %v53
    %v74 = vpack.c.b16 %v73, %v72
    %v92 = vunpack.c.l.b16 %v54
    %v93 = vunpack.c.l.b16 %v55
    %v94 = vunpack.c.l.b16 %v56
    %v95 = vunpack.c.l.b16 %v57
    %v96 = vunpack.c.l.b16 %v58
    %v97 = vunpack.c.l.b16 %v59
    %v98 = vunpack.c.l.b16 %v60
    %v99 = vunpack.c.l.b16 %v61
    %v100 = vunpack.c.l.b16 %v62
    %v101 = vunpack.c.l.b16 %v63
    %v102 = vunpack.c.l.b16 %v64
    %v103 = vunpack.c.l.b16 %v65
    %v104 = vunpack.c.l.b16 %v66
    %v105 = vunpack.c.l.b16 %v67
    %v106 = vunpack.c.l.b16 %v68
    %v107 = vunpack.c.l.b16 %v69
    %v108 = vpack.c.b16 %v93, %v92
    %v109 = vpack.c.b16 %v95, %v94
    %v110 = vpack.c.b16 %v97, %v96
    %v111 = vpack.c.b16 %v99, %v98
    %v112 = vpack.c.b16 %v101, %v100
    %v113 = vpack.c.b16 %v103, %v102
    %v114 = vpack.c.b16 %v105, %v104
    %v115 = vpack.c.b16 %v107, %v106
    %124 = vmatprep.subr.bf16.mxu0 0
    %125 = vmatpush1.bf16.msra.mxu0 %v115
    %126 = vmatprep.subr.bf16.mxu0 0
    %127 = vmatpush1.bf16.msra.mxu0 %v114
    %128 = vmatprep.subr.bf16.mxu0 0
    %129 = vmatpush1.bf16.msra.mxu0 %v113
    %130 = vmatprep.subr.bf16.mxu0 0
    %131 = vmatpush1.bf16.msra.mxu0 %v112
    %132 = vmatprep.subr.bf16.mxu0 0
    %133 = vmatpush1.bf16.msra.mxu0 %v111
    %134 = vmatprep.subr.bf16.mxu0 0
    %135 = vmatpush1.bf16.msra.mxu0 %v110
    %136 = vmatprep.subr.bf16.mxu0 0
    %137 = vmatpush1.bf16.msra.mxu0 %v109
    %138 = vmatprep.subr.bf16.mxu0 0
    %139 = vmatpush1.bf16.msra.mxu0 %v108
    %140 = vmatprep.subr.bf16.mxu0 0
    %141 = vmatpush2.bf16.msra.mxu0 0
    %142 = vmatprep.subr.bf16.mxu0 0
    %143 = vmatpush2.bf16.msra.mxu0 0
    %144 = vmatprep.subr.bf16.mxu0 0
    %145 = vmatpush2.bf16.msra.mxu0 0
    %146 = vmatprep.subr.bf16.mxu0 0
    %147 = vmatpush2.bf16.msra.mxu0 0
    %148 = vmatprep.subr.bf16.mxu0 0
    %149 = vmatpush2.bf16.msra.mxu0 0
    %150 = vmatprep.subr.bf16.mxu0 0
    %151 = vmatpush2.bf16.msra.mxu0 0
    %152 = vmatprep.subr.bf16.mxu0 0
    %153 = vmatpush2.bf16.msra.mxu0 0
    %154 = vmatprep.subr.bf16.mxu0 0
    %155 = vmatpush2.bf16.msra.mxu0 0
    %156 = vmatprep.mubr.bf16.mxu0 0
    %157 = vmatmul.mubr.bf16.gmra.mxu0 %v74
    %v158 = vpop.f32.mrf.mxu0
    %v159 = vadd.f32 0.0, %v158
    %v160 = vpop.f32.mrf.mxu0
    %v161 = vpop.f32.mrf.mxu0
    %v162 = vadd.f32 0.0, %v161
    %v163 = vpop.f32.mrf.mxu0
    %164 = vdwg.mxu0
    %v165 = vadd.f32 %v50, %v159
    %v166 = vadd.f32 %v51, %v162
    %167 = vst [vmem:[#allocation2] sm:$0xff] %v165
    %168 = vst [vmem:[#allocation2 + $0x8] sm:$0xff] %v166
    // Predicated region
    $region26: #{tpu_custom_call.1} parent=1 // pred_check
      %p169 = pneg %p44
    $region27: #{tpu_custom_call.1} parent=1 // pred_check_branch
      %171 = sbr.rel (%p169) target = $region29
    $region28: #{tpu_custom_call.1} parent=1 // pred_region
      %v172 = vld [vmem:[#allocation2] sm:$0xff]
      %v173 = vld [vmem:[#allocation2 + $0x8] sm:$0xff]
      %v174 = vld [vmem:[%s2] sm:$0x1]
      %v176 = vlaneseq
      %v177 = vshrl.u32 %v176, 7
      %v178 = vsub.s32 0, %v177
      %v179 = vrot.slane %v174, %v178
      %v181 = vadd.f32 %v172, %v179
      %v182 = vadd.f32 %v173, %v179
      %183 = vst [vmem:[#allocation8] sm:$0xff] %v181
      %184 = vst [vmem:[#allocation8 + $0x8] sm:$0xff] %v182
    $region29: #{tpu_custom_call.1} parent=1 // pred_fallthru
      _
    // Predicated region
    $region30: #{tpu_custom_call.1} parent=1 // pred_check
      _
    $region31: #{tpu_custom_call.1} parent=1 // pred_check_branch
      %186 = sbr.rel (0) target = $region33
    $region32: #{tpu_custom_call.1} parent=1 // pred_region
      %s188 = ssub.s32 256, 256
      %189 = vsyncadd [#allocation5], %s188
      %s190 = sshll.u32 [#allocation8], 4
      %s191 = int_to_ptr.vmem [resolvable:$true] %s190
      %196 = dma.vmem_to_hbm [thread:$0]  %s191, 256, %s3, [#allocation5], 128, 128, 8
    $region33: #{tpu_custom_call.1} parent=1 // pred_fallthru
      _
    // Predicated region
    $region34: #{tpu_custom_call.1} parent=1 // pred_check
      _
    $region35: #{tpu_custom_call.1} parent=1 // pred_check_branch
      %198 = sbr.rel (0) target = $region37
    $region36: #{tpu_custom_call.1} parent=1 // pred_region
      %199 = dma.done [#allocation5], 256
    $region37: #{tpu_custom_call.1} parent=1 // pred_fallthru
      _
    %200 = vsyncpa [#allocation4], 1
    %201 = vsyncpa [#allocation7], 1
    %202 = vsyncpa [#allocation5], 1

</llo_original>
